<compile_context>
chip_gen: v7x
topology: tpu7x:2x2x1
jax: 0.10.0
libtpu: 0.0.40
codegen_flags: <defaults>
</compile_context>

<pallas_src>
import functools

import jax
import jax.numpy as jnp
from jax.experimental import pallas as pl
from jax.experimental.pallas import tpu as pltpu

H1 = 64
H2 = 8
TN_MAX = 32768        # lane (batch) tile per grid step
CHUNK_MAX = 512       # in-kernel lane chunk: h1 [64, 512] f32 = 32 vregs -> stays near-register
MIN_SPLIT = 4096      # above this, force >= 2 (even) tiles so both v7x TensorCores get work


def _round_up(v, m):
    return ((v + m - 1) // m) * m


def _mlp_kernel(xt_ref, w1c0_ref, w1c1_ref, b1_ref, w2hi_ref, w2lo_ref, b2_ref,
                w3_ref, b3_ref, o_ref, *, n_chunks, chunk):
    # Grid-resident small operands (constant index_map -> DMA'd once per call).
    w1c0 = w1c0_ref[...]          # [64, 1] f32
    w1c1 = w1c1_ref[...]          # [64, 1] f32
    b1 = b1_ref[...]              # [64, 1] f32
    w2hi = w2hi_ref[...]          # [8, 64] bf16 (hi half of W2^T)
    w2lo = w2lo_ref[...]          # [8, 64] bf16 (lo half of W2^T)
    b2 = b2_ref[...]              # [8, 1]  f32
    w3 = w3_ref[...]              # [8, 1]  f32
    b3 = b3_ref[...]              # [1, 1]  f32

    def body(ci, carry):
        off = pl.multiple_of(ci * chunk, chunk)
        xx = xt_ref[:, pl.ds(off, chunk)]                           # [2, chunk]
        x0 = xx[0:1, :]                                             # [1, chunk]
        x1 = xx[1:2, :]

        # Layer 1 (K=2) on the VPU: exact f32 outer-product FMA; dropout = identity.
        h1 = jnp.maximum(w1c0 * x0 + w1c1 * x1 + b1, 0.0)           # [64, chunk]

        # Layer 2 (K=64) on the MXU: bf16 hi/lo 3-pass split (~f32 accuracy, no HIGHEST).
        h1_hi = h1.astype(jnp.bfloat16)
        h1_lo = (h1 - h1_hi.astype(jnp.float32)).astype(jnp.bfloat16)
        h2 = (jnp.dot(w2hi, h1_hi, preferred_element_type=jnp.float32)
              + jnp.dot(w2hi, h1_lo, preferred_element_type=jnp.float32)
              + jnp.dot(w2lo, h1_hi, preferred_element_type=jnp.float32))
        h2 = jnp.maximum(h2 + b2, 0.0)                              # [8, chunk]; dropout = id

        # Layer 3 (K=8) on the VPU + one sublane reduce (no dead output rows).
        y = jnp.sum(w3 * h2, axis=0, keepdims=True) + b3            # [1, chunk]
        o_ref[:, pl.ds(off, chunk)] = y
        return carry

    jax.lax.fori_loop(0, n_chunks, body, 0)


def prepare_params(params):
    """One-time layout prep (hoisted out of the per-forward path)."""
    w1, b1, w2, b2, w3, b3 = params
    w1 = w1.astype(jnp.float32)
    w1c0 = w1[0].reshape(H1, 1)                                     # [64, 1]
    w1c1 = w1[1].reshape(H1, 1)                                     # [64, 1]
    b1c = b1.reshape(H1, 1).astype(jnp.float32)                     # [64, 1]
    w2t = w2.T.astype(jnp.float32)                                  # [8, 64]
    w2hi = w2t.astype(jnp.bfloat16)                                 # hi/lo split precomputed
    w2lo = (w2t - w2hi.astype(jnp.float32)).astype(jnp.bfloat16)
    b2c = b2.reshape(H2, 1).astype(jnp.float32)                     # [8, 1]
    w3c = w3.reshape(H2, 1).astype(jnp.float32)                     # [8, 1]
    b3c = b3.reshape(1, 1).astype(jnp.float32)                      # [1, 1]
    return (w1c0, w1c1, b1c, w2hi, w2lo, b2c, w3c, b3c)


def _pick_tiles(n_pad):
    """Lane tile (tn) and in-kernel chunk. tn is always a multiple of 128."""
    if n_pad <= MIN_SPLIT:
        tn = n_pad
    else:
        n_tiles = max(2, -(-n_pad // TN_MAX))
        n_tiles += n_tiles % 2                 # even tile count (v7x: 2 TensorCores)
        tn = _round_up(-(-n_pad // n_tiles), 512)
    chunk = next(c for c in (CHUNK_MAX, 256, 128) if tn % c == 0)
    return tn, chunk


def backbone_forward(x, prepared):
    """x: [N, 2] float32 -> [N, 1] float32 (inference: dropout = identity)."""
    w1c0, w1c1, b1c, w2hi, w2lo, b2c, w3c, b3c = prepared
    n = x.shape[0]
    n_pad = _round_up(n, 128)                  # lane alignment only, NOT rounded to the tile
    tn, chunk = _pick_tiles(n_pad)
    grid = (pl.cdiv(n_pad, tn),)               # boundary tile handled by Pallas masking

    # Transposed, lane-major input [2, N_pad]: no 8-sublane zero-pad in HBM.
    x = x.astype(jnp.float32)
    if n_pad == n:
        x_t = x.T
    else:
        x_t = jnp.zeros((2, n_pad), jnp.float32).at[:, :n].set(x.T)

    x_spec = pl.BlockSpec((2, tn), lambda i: (0, i))       # sublane dim == full array dim
    out_spec = pl.BlockSpec((1, tn), lambda i: (0, i))     # lane-dense output

    def const_spec(shape):                     # grid-resident (DMA'd once per call)
        return pl.BlockSpec(shape, lambda i: (0, 0))

    kernel = functools.partial(_mlp_kernel, n_chunks=tn // chunk, chunk=chunk)

    out_t = pl.pallas_call(
        kernel,
        out_shape=jax.ShapeDtypeStruct((1, n_pad), jnp.float32),
        grid_spec=pltpu.PrefetchScalarGridSpec(
            num_scalar_prefetch=0,
            grid=grid,
            in_specs=[x_spec,
                      const_spec((H1, 1)), const_spec((H1, 1)), const_spec((H1, 1)),
                      const_spec((H2, H1)), const_spec((H2, H1)), const_spec((H2, 1)),
                      const_spec((H2, 1)), const_spec((1, 1))],
            out_specs=out_spec,
        ),
        compiler_params=pltpu.CompilerParams(
            dimension_semantics=("parallel",),
            vmem_limit_bytes=32 * 1024 * 1024),
    )(x_t, w1c0, w1c1, b1c, w2hi, w2lo, b2c, w3c, b3c)

    # NOTE: the [1, N] -> [N, 1] relayout below is kept only to preserve the module's output
    # shape; perf-sensitive callers should consume the flat lane-major row out_t[0] directly.
    return out_t[0, :n].reshape(n, 1)


def init_params(key):
    """Deterministic init matching nn.Linear shapes: (2,64), (64,8), (8,1)."""
    ks = jax.random.split(key, 6)

    def linear(kw, kb, fan_in, fan_out):
        bound = 1.0 / jnp.sqrt(fan_in)
        w = jax.random.uniform(kw, (fan_in, fan_out), jnp.float32, -bound, bound)
        b = jax.random.uniform(kb, (fan_out,), jnp.float32, -bound, bound)
        return w, b

    w1, b1 = linear(ks[0], ks[1], 2, 64)
    w2, b2 = linear(ks[2], ks[3], 64, 8)
    w3, b3 = linear(ks[4], ks[5], 8, 1)
    return (w1, b1, w2, b2, w3, b3)


def reference_forward(x, params):
    w1, b1, w2, b2, w3, b3 = params
    hp = jax.lax.Precision.HIGHEST
    h = jnp.maximum(jnp.dot(x, w1, precision=hp) + b1, 0.0)
    h = jnp.maximum(jnp.dot(h, w2, precision=hp) + b2, 0.0)
    return jnp.dot(h, w3, precision=hp) + b3


if __name__ == "__main__":
    key = jax.random.PRNGKey(0)
    pkey, xkey = jax.random.split(key)
    params = init_params(pkey)
    prepared = prepare_params(params)          # one-time layout prep (not per-call)

    fwd = jax.jit(backbone_forward)

    # n=8: primary small case (single 128-lane tile, single chunk).
    # n=4400: exercises the in-kernel chunk loop, a 2-step grid, and a partial boundary tile.
    for n in (8, 4400):
        x = jax.random.normal(jax.random.fold_in(xkey, n), (n, 2), jnp.float32)
        out = jax.block_until_ready(fwd(x, prepared))
        ref = reference_forward(x, params)
        assert out.shape == (n, 1), out.shape
        # Layer 2 runs as a 3-pass bf16 hi/lo split (~Precision.HIGH); tolerance sized for that.
        err = float(jnp.max(jnp.abs(out - ref)))
        assert jnp.allclose(out, ref, atol=2e-4, rtol=2e-4), (n, err)

    print("KERNEL_OK")
</pallas_src>

<mosaic_0001>
module attributes {stable_mosaic.version = 11 : i64} {
  func.func @_mlp_kernel(%arg0: i32, %arg1: memref<2x128xf32, #tpu.memory_space<vmem>>, %arg2: memref<64x1xf32, #tpu.memory_space<vmem>>, %arg3: memref<64x1xf32, #tpu.memory_space<vmem>>, %arg4: memref<64x1xf32, #tpu.memory_space<vmem>>, %arg5: memref<8x64xbf16, #tpu.memory_space<vmem>>, %arg6: memref<8x64xbf16, #tpu.memory_space<vmem>>, %arg7: memref<8x1xf32, #tpu.memory_space<vmem>>, %arg8: memref<8x1xf32, #tpu.memory_space<vmem>>, %arg9: memref<1x1xf32, #tpu.memory_space<vmem>>, %arg10: memref<1x128xf32, #tpu.memory_space<vmem>>) attributes {dimension_semantics = [#tpu.dimension_semantics<parallel>], iteration_bounds = array<i64: 1>, scalar_prefetch = 0 : i64, scratch_operands = 0 : i64, tpu.core_type = #tpu.core_type<tc>, window_params = [{transform_indices = @transform_0, window_bounds = array<i64: 2, 128>}, {pipeline_mode = #tpu.pipeline_mode<synchronous>, transform_indices = @transform_1, window_bounds = array<i64: 64, 1>}, {pipeline_mode = #tpu.pipeline_mode<synchronous>, transform_indices = @transform_2, window_bounds = array<i64: 64, 1>}, {pipeline_mode = #tpu.pipeline_mode<synchronous>, transform_indices = @transform_3, window_bounds = array<i64: 64, 1>}, {pipeline_mode = #tpu.pipeline_mode<synchronous>, transform_indices = @transform_4, window_bounds = array<i64: 8, 64>}, {pipeline_mode = #tpu.pipeline_mode<synchronous>, transform_indices = @transform_5, window_bounds = array<i64: 8, 64>}, {pipeline_mode = #tpu.pipeline_mode<synchronous>, transform_indices = @transform_6, window_bounds = array<i64: 8, 1>}, {pipeline_mode = #tpu.pipeline_mode<synchronous>, transform_indices = @transform_7, window_bounds = array<i64: 8, 1>}, {pipeline_mode = #tpu.pipeline_mode<synchronous>, transform_indices = @transform_8, window_bounds = array<i64: 1, 1>}, {transform_indices = @transform_9, window_bounds = array<i64: 1, 128>}]} {
    %c0 = arith.constant 0 : index
    %c0_0 = arith.constant 0 : index
    %0 = vector.load %arg2[%c0, %c0_0] : memref<64x1xf32, #tpu.memory_space<vmem>>, vector<64x1xf32>
    %c0_1 = arith.constant 0 : index
    %c0_2 = arith.constant 0 : index
    %1 = vector.load %arg3[%c0_1, %c0_2] : memref<64x1xf32, #tpu.memory_space<vmem>>, vector<64x1xf32>
    %c0_3 = arith.constant 0 : index
    %c0_4 = arith.constant 0 : index
    %2 = vector.load %arg4[%c0_3, %c0_4] : memref<64x1xf32, #tpu.memory_space<vmem>>, vector<64x1xf32>
    %c0_5 = arith.constant 0 : index
    %c0_6 = arith.constant 0 : index
    %3 = vector.load %arg5[%c0_5, %c0_6] : memref<8x64xbf16, #tpu.memory_space<vmem>>, vector<8x64xbf16>
    %c0_7 = arith.constant 0 : index
    %c0_8 = arith.constant 0 : index
    %4 = vector.load %arg6[%c0_7, %c0_8] : memref<8x64xbf16, #tpu.memory_space<vmem>>, vector<8x64xbf16>
    %c0_9 = arith.constant 0 : index
    %c0_10 = arith.constant 0 : index
    %5 = vector.load %arg7[%c0_9, %c0_10] : memref<8x1xf32, #tpu.memory_space<vmem>>, vector<8x1xf32>
    %c0_11 = arith.constant 0 : index
    %c0_12 = arith.constant 0 : index
    %6 = vector.load %arg8[%c0_11, %c0_12] : memref<8x1xf32, #tpu.memory_space<vmem>>, vector<8x1xf32>
    %c0_13 = arith.constant 0 : index
    %c0_14 = arith.constant 0 : index
    %7 = vector.load %arg9[%c0_13, %c0_14] : memref<1x1xf32, #tpu.memory_space<vmem>>, vector<1x1xf32>
    %c0_i32 = arith.constant 0 : i32
    %c128_i32 = arith.constant 128 : i32
    %8 = arith.muli %c0_i32, %c128_i32 : i32
    %9 = tpu.assume_multiple %8, 128 : i32
    %c0_15 = arith.constant 0 : index
    %10 = arith.index_cast %9 : i32 to index
    %11 = vector.load %arg1[%c0_15, %10] : memref<2x128xf32, #tpu.memory_space<vmem>>, vector<2x128xf32>
    %12 = vector.extract_strided_slice %11 {offsets = [0, 0], sizes = [1, 128], strides = [1, 1]} : vector<2x128xf32> to vector<1x128xf32>
    %13 = vector.extract_strided_slice %11 {offsets = [1, 0], sizes = [1, 128], strides = [1, 1]} : vector<2x128xf32> to vector<1x128xf32>
    %14 = vector.broadcast %0 : vector<64x1xf32> to vector<64x128xf32>
    %15 = vector.broadcast %12 : vector<1x128xf32> to vector<64x128xf32>
    %16 = arith.mulf %14, %15 : vector<64x128xf32>
    %17 = vector.broadcast %1 : vector<64x1xf32> to vector<64x128xf32>
    %18 = vector.broadcast %13 : vector<1x128xf32> to vector<64x128xf32>
    %19 = arith.mulf %17, %18 : vector<64x128xf32>
    %20 = arith.addf %16, %19 : vector<64x128xf32>
    %21 = vector.broadcast %2 : vector<64x1xf32> to vector<64x128xf32>
    %22 = arith.addf %20, %21 : vector<64x128xf32>
    %cst = arith.constant 0.000000e+00 : f32
    %23 = vector.broadcast %cst : f32 to vector<64x128xf32>
    %24 = arith.maximumf %22, %23 : vector<64x128xf32>
    %25 = arith.truncf %24 : vector<64x128xf32> to vector<64x128xbf16>
    %26 = arith.extf %25 : vector<64x128xbf16> to vector<64x128xf32>
    %27 = arith.subf %24, %26 : vector<64x128xf32>
    %28 = arith.truncf %27 : vector<64x128xf32> to vector<64x128xbf16>
    %cst_16 = arith.constant dense<0.000000e+00> : vector<8x128xf32>
    %29 = tpu.matmul %3, %25, %cst_16 {dimension_numbers = #tpu.dot_dimension_numbers<[1], [0], [0], [1], [0, 0, 1, 1], [], []>} : vector<8x64xbf16>, vector<64x128xbf16>, vector<8x128xf32> -> vector<8x128xf32>
    %cst_17 = arith.constant dense<0.000000e+00> : vector<8x128xf32>
    %30 = tpu.matmul %3, %28, %cst_17 {dimension_numbers = #tpu.dot_dimension_numbers<[1], [0], [0], [1], [0, 0, 1, 1], [], []>} : vector<8x64xbf16>, vector<64x128xbf16>, vector<8x128xf32> -> vector<8x128xf32>
    %31 = arith.addf %29, %30 : vector<8x128xf32>
    %cst_18 = arith.constant dense<0.000000e+00> : vector<8x128xf32>
    %32 = tpu.matmul %4, %25, %cst_18 {dimension_numbers = #tpu.dot_dimension_numbers<[1], [0], [0], [1], [0, 0, 1, 1], [], []>} : vector<8x64xbf16>, vector<64x128xbf16>, vector<8x128xf32> -> vector<8x128xf32>
    %33 = arith.addf %31, %32 : vector<8x128xf32>
    %34 = vector.broadcast %5 : vector<8x1xf32> to vector<8x128xf32>
    %35 = arith.addf %33, %34 : vector<8x128xf32>
    %cst_19 = arith.constant 0.000000e+00 : f32
    %36 = vector.broadcast %cst_19 : f32 to vector<8x128xf32>
    %37 = arith.maximumf %35, %36 : vector<8x128xf32>
    %38 = vector.broadcast %6 : vector<8x1xf32> to vector<8x128xf32>
    %39 = arith.mulf %38, %37 : vector<8x128xf32>
    %cst_20 = arith.constant dense<0.000000e+00> : vector<128xf32>
    %40 = vector.multi_reduction <add>, %39, %cst_20 [0] : vector<8x128xf32> to vector<128xf32>
    %41 = vector.shape_cast %40 : vector<128xf32> to vector<1x128xf32>
    %42 = vector.broadcast %7 : vector<1x1xf32> to vector<1x128xf32>
    %43 = arith.addf %41, %42 : vector<1x128xf32>
    %c0_21 = arith.constant 0 : index
    %44 = arith.index_cast %9 : i32 to index
    %45 = vector.load %arg10[%c0_21, %44] : memref<1x128xf32, #tpu.memory_space<vmem>>, vector<1x128xf32>
    tpu.vector_store %arg10[%c0_21, %44], %43 {strides = array<i32>} : memref<1x128xf32, #tpu.memory_space<vmem>>, vector<1x128xf32>,
    %c1_i32 = arith.constant 1 : i32
    return
  }
  func.func @transform_0(%arg0: i32) -> (i32, i32) {
    %c0_i32 = arith.constant 0 : i32
    %c0_i32_0 = arith.constant 0 : i32
    return %c0_i32, %arg0 : i32, i32
  }
  func.func @transform_1(%arg0: i32) -> (i32, i32) {
    %c0_i32 = arith.constant 0 : i32
    %c0_i32_0 = arith.constant 0 : i32
    %c0_i32_1 = arith.constant 0 : i32
    return %c0_i32, %c0_i32_0 : i32, i32
  }
  func.func @transform_2(%arg0: i32) -> (i32, i32) {
    %c0_i32 = arith.constant 0 : i32
    %c0_i32_0 = arith.constant 0 : i32
    %c0_i32_1 = arith.constant 0 : i32
    return %c0_i32, %c0_i32_0 : i32, i32
  }
  func.func @transform_3(%arg0: i32) -> (i32, i32) {
    %c0_i32 = arith.constant 0 : i32
    %c0_i32_0 = arith.constant 0 : i32
    %c0_i32_1 = arith.constant 0 : i32
    return %c0_i32, %c0_i32_0 : i32, i32
  }
  func.func @transform_4(%arg0: i32) -> (i32, i32) {
    %c0_i32 = arith.constant 0 : i32
    %c0_i32_0 = arith.constant 0 : i32
    %c0_i32_1 = arith.constant 0 : i32
    return %c0_i32, %c0_i32_0 : i32, i32
  }
  func.func @transform_5(%arg0: i32) -> (i32, i32) {
    %c0_i32 = arith.constant 0 : i32
    %c0_i32_0 = arith.constant 0 : i32
    %c0_i32_1 = arith.constant 0 : i32
    return %c0_i32, %c0_i32_0 : i32, i32
  }
  func.func @transform_6(%arg0: i32) -> (i32, i32) {
    %c0_i32 = arith.constant 0 : i32
    %c0_i32_0 = arith.constant 0 : i32
    %c0_i32_1 = arith.constant 0 : i32
    return %c0_i32, %c0_i32_0 : i32, i32
  }
  func.func @transform_7(%arg0: i32) -> (i32, i32) {
    %c0_i32 = arith.constant 0 : i32
    %c0_i32_0 = arith.constant 0 : i32
    %c0_i32_1 = arith.constant 0 : i32
    return %c0_i32, %c0_i32_0 : i32, i32
  }
  func.func @transform_8(%arg0: i32) -> (i32, i32) {
    %c0_i32 = arith.constant 0 : i32
    %c0_i32_0 = arith.constant 0 : i32
    %c0_i32_1 = arith.constant 0 : i32
    return %c0_i32, %c0_i32_0 : i32, i32
  }
  func.func @transform_9(%arg0: i32) -> (i32, i32) {
    %c0_i32 = arith.constant 0 : i32
    %c0_i32_0 = arith.constant 0 : i32
    return %c0_i32, %arg0 : i32, i32
  }
}

</mosaic_0001>

<llo_original>
// kernel: backbone_forward.1
$region0: #{backbone_forward.1}
  #allocation0 [shape = 'u32[]', space=smem, size = 0x4, offset = 0x4, fixed_abs, tag = 'smem constant byte address 0x4 - core index']
  #allocation1 [shape = 'u32[144,128]{1,0:T(1,128)}', space=vmem, size = 0x12000, scoped, tag = 'internal scratch']
  #allocation2 [shape = 'f32[1,1]{1,0:T(1,128)S(1)}', space=vmem, size = 0x200, scoped, tag = 'scoped memory for backbone_forward.1']
  %s0 = inlined_call_operand.vmem [shape: f32[2,128], index: 0, kind: input, shape index: {}]
  %s1 = inlined_call_operand.vmem [shape: f32[64,1], index: 1, kind: input, shape index: {}]
  %s2 = inlined_call_operand.vmem [shape: f32[64,1], index: 2, kind: input, shape index: {}]
  %s3 = inlined_call_operand.vmem [shape: f32[64,1], index: 3, kind: input, shape index: {}]
  %s4 = inlined_call_operand.vmem [shape: bf16[8,64], index: 4, kind: input, shape index: {}]
  %s5 = inlined_call_operand.vmem [shape: bf16[8,64], index: 5, kind: input, shape index: {}]
  %s6 = inlined_call_operand.vmem [shape: f32[8,1], index: 6, kind: input, shape index: {}]
  %s7 = inlined_call_operand.vmem [shape: f32[8,1], index: 7, kind: input, shape index: {}]
  %s8 = inlined_call_operand.<no memory space> [shape: f32[1,1], index: 8, kind: input, shape index: {}]
  %s9 = inlined_call_operand.vmem [shape: f32[1,128], index: 9, kind: output, shape index: {}]
  %s10 = sld [smem:[#allocation0]]
  $region46: #{backbone_forward.1} parent=0
    _
  %s12 = ssub.s32 1, %s10
  %s13 = scalar_select 0, %s12, %s10
  %v14 = vstv %s8
  %15 = vst [vmem:[#allocation2] sm:$0x1] %v14
  // Predicated region
  $region2: #{backbone_forward.1} parent=0 // pred_check
    _
  $region3: #{backbone_forward.1} parent=0 // pred_check_branch
    %17 = sbr.rel (0) target = $region5
  $region4: #{backbone_forward.1} parent=0 // pred_region
    _
  $region5: #{backbone_forward.1} parent=0 // pred_fallthru
    _
  // Predicated region
  $region6: #{backbone_forward.1} parent=0 // pred_check
    _
  $region7: #{backbone_forward.1} parent=0 // pred_check_branch
    %19 = sbr.rel (0) target = $region9
  $region8: #{backbone_forward.1} parent=0 // pred_region
    _
  $region9: #{backbone_forward.1} parent=0 // pred_fallthru
    _
  // Predicated region
  $region10: #{backbone_forward.1} parent=0 // pred_check
    _
  $region11: #{backbone_forward.1} parent=0 // pred_check_branch
    %21 = sbr.rel (0) target = $region13
  $region12: #{backbone_forward.1} parent=0 // pred_region
    _
  $region13: #{backbone_forward.1} parent=0 // pred_fallthru
    _
  // Predicated region
  $region14: #{backbone_forward.1} parent=0 // pred_check
    _
  $region15: #{backbone_forward.1} parent=0 // pred_check_branch
    %23 = sbr.rel (0) target = $region17
  $region16: #{backbone_forward.1} parent=0 // pred_region
    _
  $region17: #{backbone_forward.1} parent=0 // pred_fallthru
    _
  // Predicated region
  $region18: #{backbone_forward.1} parent=0 // pred_check
    _
  $region19: #{backbone_forward.1} parent=0 // pred_check_branch
    %25 = sbr.rel (0) target = $region21
  $region20: #{backbone_forward.1} parent=0 // pred_region
    _
  $region21: #{backbone_forward.1} parent=0 // pred_fallthru
    _
  // Predicated region
  $region22: #{backbone_forward.1} parent=0 // pred_check
    _
  $region23: #{backbone_forward.1} parent=0 // pred_check_branch
    %27 = sbr.rel (0) target = $region25
  $region24: #{backbone_forward.1} parent=0 // pred_region
    _
  $region25: #{backbone_forward.1} parent=0 // pred_fallthru
    _
  // Predicated region
  $region26: #{backbone_forward.1} parent=0 // pred_check
    _
  $region27: #{backbone_forward.1} parent=0 // pred_check_branch
    %29 = sbr.rel (0) target = $region29
  $region28: #{backbone_forward.1} parent=0 // pred_region
    _
  $region29: #{backbone_forward.1} parent=0 // pred_fallthru
    _
  // Predicated region
  $region30: #{backbone_forward.1} parent=0 // pred_check
    _
  $region31: #{backbone_forward.1} parent=0 // pred_check_branch
    %31 = sbr.rel (0) target = $region33
  $region32: #{backbone_forward.1} parent=0 // pred_region
    _
  $region33: #{backbone_forward.1} parent=0 // pred_fallthru
    _
  // Predicated region
  $region34: #{backbone_forward.1} parent=0 // pred_check
    _
  $region35: #{backbone_forward.1} parent=0 // pred_check_branch
    %33 = sbr.rel (0) target = $region37
  $region36: #{backbone_forward.1} parent=0 // pred_region
    _
  $region37: #{backbone_forward.1} parent=0 // pred_fallthru
    _
  %v35 = vld [vmem:[%s1] sm:$0xff]
  %v36 = vld [vmem:[%s1 + $0x8] sm:$0xff]
  %v37 = vld [vmem:[%s1 + $0x10] sm:$0xff]
  %v38 = vld [vmem:[%s1 + $0x18] sm:$0xff]
  %v39 = vld [vmem:[%s1 + $0x20] sm:$0xff]
  %v40 = vld [vmem:[%s1 + $0x28] sm:$0xff]
  %v41 = vld [vmem:[%s1 + $0x30] sm:$0xff]
  %v42 = vld [vmem:[%s1 + $0x38] sm:$0xff]
  %v43 = vld [vmem:[%s2] sm:$0xff]
  %v44 = vld [vmem:[%s2 + $0x8] sm:$0xff]
  %v45 = vld [vmem:[%s2 + $0x10] sm:$0xff]
  %v46 = vld [vmem:[%s2 + $0x18] sm:$0xff]
  %v47 = vld [vmem:[%s2 + $0x20] sm:$0xff]
  %v48 = vld [vmem:[%s2 + $0x28] sm:$0xff]
  %v49 = vld [vmem:[%s2 + $0x30] sm:$0xff]
  %v50 = vld [vmem:[%s2 + $0x38] sm:$0xff]
  %v51 = vld [vmem:[%s3] sm:$0xff]
  %v52 = vld [vmem:[%s3 + $0x8] sm:$0xff]
  %v53 = vld [vmem:[%s3 + $0x10] sm:$0xff]
  %v54 = vld [vmem:[%s3 + $0x18] sm:$0xff]
  %v55 = vld [vmem:[%s3 + $0x20] sm:$0xff]
  %v56 = vld [vmem:[%s3 + $0x28] sm:$0xff]
  %v57 = vld [vmem:[%s3 + $0x30] sm:$0xff]
  %v58 = vld [vmem:[%s3 + $0x38] sm:$0xff]
  %v59 = vld [vmem:[%s4] sm:$0xf]
  %v60 = vld [vmem:[%s5] sm:$0xf]
  %v61 = vld [vmem:[%s6] sm:$0xff]
  %v62 = vld [vmem:[%s7] sm:$0xff]
  %v63 = vld [vmem:[#allocation2] sm:$0x1]
  %v64 = vld [vmem:[%s0] sm:$0x3]
  %66 = vset.pattern.permute.xlu0 0
  %67 = vperm.xlu0 %66, %v35
  %v68 = vpop.permute.xlu0 %67
  %71 = vset.pattern.permute.xlu0 0
  %72 = vperm.xlu0 %71, %v36
  %v73 = vpop.permute.xlu0 %72
  %76 = vset.pattern.permute.xlu0 0
  %77 = vperm.xlu0 %76, %v37
  %v78 = vpop.permute.xlu0 %77
  %81 = vset.pattern.permute.xlu0 0
  %82 = vperm.xlu0 %81, %v38
  %v83 = vpop.permute.xlu0 %82
  %86 = vset.pattern.permute.xlu0 0
  %87 = vperm.xlu0 %86, %v39
  %v88 = vpop.permute.xlu0 %87
  %91 = vset.pattern.permute.xlu0 0
  %92 = vperm.xlu0 %91, %v40
  %v93 = vpop.permute.xlu0 %92
  %96 = vset.pattern.permute.xlu0 0
  %97 = vperm.xlu0 %96, %v41
  %v98 = vpop.permute.xlu0 %97
  %101 = vset.pattern.permute.xlu0 0
  %102 = vperm.xlu0 %101, %v42
  %v103 = vpop.permute.xlu0 %102
  %v105 = vlaneseq
  %v106 = vshrl.u32 %v105, 7
  %v107 = vsub.s32 0, %v106
  %v108 = vrot.slane %v64, %v107
  %v109 = vmul.f32 %v68, %v108
  %v110 = vmul.f32 %v73, %v108
  %v111 = vmul.f32 %v78, %v108
  %v112 = vmul.f32 %v83, %v108
  %v113 = vmul.f32 %v88, %v108
  %v114 = vmul.f32 %v93, %v108
  %v115 = vmul.f32 %v98, %v108
  %v116 = vmul.f32 %v103, %v108
  %118 = vset.pattern.permute.xlu0 0
  %119 = vperm.xlu0 %118, %v43
  %v120 = vpop.permute.xlu0 %119
  %123 = vset.pattern.permute.xlu0 0
  %124 = vperm.xlu0 %123, %v44
  %v125 = vpop.permute.xlu0 %124
  %128 = vset.pattern.permute.xlu0 0
  %129 = vperm.xlu0 %128, %v45
  %v130 = vpop.permute.xlu0 %129
  %133 = vset.pattern.permute.xlu0 0
  %134 = vperm.xlu0 %133, %v46
  %v135 = vpop.permute.xlu0 %134
  %138 = vset.pattern.permute.xlu0 0
  %139 = vperm.xlu0 %138, %v47
  %v140 = vpop.permute.xlu0 %139
  %143 = vset.pattern.permute.xlu0 0
  %144 = vperm.xlu0 %143, %v48
  %v145 = vpop.permute.xlu0 %144
  %148 = vset.pattern.permute.xlu0 0
  %149 = vperm.xlu0 %148, %v49
  %v150 = vpop.permute.xlu0 %149
  %153 = vset.pattern.permute.xlu0 0
  %154 = vperm.xlu0 %153, %v50
  %v155 = vpop.permute.xlu0 %154
  %v157 = vlaneseq
  %v158 = vshrl.u32 %v157, 7
  %v159 = vsub.s32 1, %v158
  %v160 = vrot.slane %v64, %v159
  %v161 = vmul.f32 %v120, %v160
  %v162 = vmul.f32 %v125, %v160
  %v163 = vmul.f32 %v130, %v160
  %v164 = vmul.f32 %v135, %v160
  %v165 = vmul.f32 %v140, %v160
  %v166 = vmul.f32 %v145, %v160
  %v167 = vmul.f32 %v150, %v160
  %v168 = vmul.f32 %v155, %v160
  %v169 = vadd.f32 %v109, %v161
  %v170 = vadd.f32 %v110, %v162
  %v171 = vadd.f32 %v111, %v163
  %v172 = vadd.f32 %v112, %v164
  %v173 = vadd.f32 %v113, %v165
  %v174 = vadd.f32 %v114, %v166
  %v175 = vadd.f32 %v115, %v167
  %v176 = vadd.f32 %v116, %v168
  %178 = vset.pattern.permute.xlu0 0
  %179 = vperm.xlu0 %178, %v51
  %v180 = vpop.permute.xlu0 %179
  %183 = vset.pattern.permute.xlu0 0
  %184 = vperm.xlu0 %183, %v52
  %v185 = vpop.permute.xlu0 %184
  %188 = vset.pattern.permute.xlu0 0
  %189 = vperm.xlu0 %188, %v53
  %v190 = vpop.permute.xlu0 %189
  %193 = vset.pattern.permute.xlu0 0
  %194 = vperm.xlu0 %193, %v54
  %v195 = vpop.permute.xlu0 %194
  %198 = vset.pattern.permute.xlu0 0
  %199 = vperm.xlu0 %198, %v55
  %v200 = vpop.permute.xlu0 %199
  %203 = vset.pattern.permute.xlu0 0
  %204 = vperm.xlu0 %203, %v56
  %v205 = vpop.permute.xlu0 %204
  %208 = vset.pattern.permute.xlu0 0
  %209 = vperm.xlu0 %208, %v57
  %v210 = vpop.permute.xlu0 %209
  %213 = vset.pattern.permute.xlu0 0
  %214 = vperm.xlu0 %213, %v58
  %v215 = vpop.permute.xlu0 %214
  %v217 = vadd.f32 %v169, %v180
  %v218 = vadd.f32 %v170, %v185
  %v219 = vadd.f32 %v171, %v190
  %v220 = vadd.f32 %v172, %v195
  %v221 = vadd.f32 %v173, %v200
  %v222 = vadd.f32 %v174, %v205
  %v223 = vadd.f32 %v175, %v210
  %v224 = vadd.f32 %v176, %v215
  %v225 = vmax.f32 %v217, 0.0
  %v226 = vmax.f32 %v218, 0.0
  %v227 = vmax.f32 %v219, 0.0
  %v228 = vmax.f32 %v220, 0.0
  %v229 = vmax.f32 %v221, 0.0
  %v230 = vmax.f32 %v222, 0.0
  %v231 = vmax.f32 %v223, 0.0
  %v232 = vmax.f32 %v224, 0.0
  %v233 = vpack.c.bf16 %v226, %v225
  %v234 = vpack.c.bf16 %v228, %v227
  %v235 = vpack.c.bf16 %v230, %v229
  %v236 = vpack.c.bf16 %v232, %v231
  %v237 = vunpack.c.l.bf16 %v233
  %v238 = vunpack.c.h.bf16 %v233
  %v239 = vunpack.c.l.bf16 %v234
  %v240 = vunpack.c.h.bf16 %v234
  %v241 = vunpack.c.l.bf16 %v235
  %v242 = vunpack.c.h.bf16 %v235
  %v243 = vunpack.c.l.bf16 %v236
  %v244 = vunpack.c.h.bf16 %v236
  %v245 = vsub.f32 %v225, %v237
  %v246 = vsub.f32 %v226, %v238
  %v247 = vsub.f32 %v227, %v239
  %v248 = vsub.f32 %v228, %v240
  %v249 = vsub.f32 %v229, %v241
  %v250 = vsub.f32 %v230, %v242
  %v251 = vsub.f32 %v231, %v243
  %v252 = vsub.f32 %v232, %v244
  %v253 = vpack.c.bf16 %v246, %v245
  %v254 = vpack.c.bf16 %v248, %v247
  %v255 = vpack.c.bf16 %v250, %v249
  %v256 = vpack.c.bf16 %v252, %v251
  %vm257 = vcmask 523264
  %v259 = vsel %vm257, %v59, 0
  %261 = vmatprep.subr.bf16.mxu0 0
  %262 = vmatpush1.bf16.msra.mxu0 %v253
  %263 = vmatprep.subr.bf16.mxu0 0
  %264 = vmatpush1.bf16.msra.mxu0 %v254
  %265 = vmatprep.subr.bf16.mxu0 0
  %266 = vmatpush1.bf16.msra.mxu0 %v255
  %267 = vmatprep.subr.bf16.mxu0 0
  %268 = vmatpush1.bf16.msra.mxu0 %v256
  %269 = vmatprep.subr.bf16.mxu0 0
  %270 = vmatpush1.bf16.msra.mxu0 0
  %271 = vmatprep.subr.bf16.mxu0 0
  %272 = vmatpush1.bf16.msra.mxu0 0
  %273 = vmatprep.subr.bf16.mxu0 0
  %274 = vmatpush1.bf16.msra.mxu0 0
  %275 = vmatprep.subr.bf16.mxu0 0
  %276 = vmatpush1.bf16.msra.mxu0 0
  %277 = vmatprep.subr.bf16.mxu0 0
  %278 = vmatpush1.bf16.msra.mxu0 0
  %279 = vmatprep.subr.bf16.mxu0 0
  %280 = vmatpush1.bf16.msra.mxu0 0
  %281 = vmatprep.subr.bf16.mxu0 0
  %282 = vmatpush1.bf16.msra.mxu0 0
  %283 = vmatprep.subr.bf16.mxu0 0
  %284 = vmatpush1.bf16.msra.mxu0 0
  %285 = vmatprep.subr.bf16.mxu0 0
  %286 = vmatpush1.bf16.msra.mxu0 0
  %287 = vmatprep.subr.bf16.mxu0 0
  %288 = vmatpush1.bf16.msra.mxu0 0
  %289 = vmatprep.subr.bf16.mxu0 0
  %290 = vmatpush1.bf16.msra.mxu0 0
  %291 = vmatprep.subr.bf16.mxu0 0
  %292 = vmatpush1.bf16.msra.mxu0 0
  %293 = vmatprep.mubr.bf16.mxu0 0
  %294 = vmatmul.mubr.bf16.gmra.mrb[0].mxu0 %v259
  %v295 = vpop.f32.mrb[0].mxu0
  %v296 = vadd.f32 0.0, %v295
  %v297 = vpop.f32.mrb[0].mxu0
  %v298 = vpop.f32.mrb[0].mxu0
  %v299 = vpop.f32.mrb[0].mxu0
  %300 = vdwg.mxu0
  %301 = vmatprep.subr.bf16.mxu0 0
  %302 = vmatpush1.bf16.msra.mxu0 %v233
  %303 = vmatprep.subr.bf16.mxu0 0
  %304 = vmatpush1.bf16.msra.mxu0 %v234
  %305 = vmatprep.subr.bf16.mxu0 0
  %306 = vmatpush1.bf16.msra.mxu0 %v235
  %307 = vmatprep.subr.bf16.mxu0 0
  %308 = vmatpush1.bf16.msra.mxu0 %v236
  %309 = vmatprep.subr.bf16.mxu0 0
  %310 = vmatpush1.bf16.msra.mxu0 0
  %311 = vmatprep.subr.bf16.mxu0 0
  %312 = vmatpush1.bf16.msra.mxu0 0
  %313 = vmatprep.subr.bf16.mxu0 0
  %314 = vmatpush1.bf16.msra.mxu0 0
  %315 = vmatprep.subr.bf16.mxu0 0
  %316 = vmatpush1.bf16.msra.mxu0 0
  %317 = vmatprep.subr.bf16.mxu0 0
  %318 = vmatpush1.bf16.msra.mxu0 0
  %319 = vmatprep.subr.bf16.mxu0 0
  %320 = vmatpush1.bf16.msra.mxu0 0
  %321 = vmatprep.subr.bf16.mxu0 0
  %322 = vmatpush1.bf16.msra.mxu0 0
  %323 = vmatprep.subr.bf16.mxu0 0
  %324 = vmatpush1.bf16.msra.mxu0 0
  %325 = vmatprep.subr.bf16.mxu0 0
  %326 = vmatpush1.bf16.msra.mxu0 0
  %327 = vmatprep.subr.bf16.mxu0 0
  %328 = vmatpush1.bf16.msra.mxu0 0
  %329 = vmatprep.subr.bf16.mxu0 0
  %330 = vmatpush1.bf16.msra.mxu0 0
  %331 = vmatprep.subr.bf16.mxu0 0
  %332 = vmatpush1.bf16.msra.mxu0 0
  %333 = vmatprep.mubr.bf16.mxu0 0
  %334 = vmatmul.mubr.bf16.gmra.mrb[0].mxu0 %v259
  %v335 = vpop.f32.mrb[0].mxu0
  %v336 = vadd.f32 %v296, %v335
  %v337 = vpop.f32.mrb[0].mxu0
  %v338 = vpop.f32.mrb[0].mxu0
  %v339 = vpop.f32.mrb[0].mxu0
  %340 = vdwg.mxu0
  %v342 = vsel %vm257, %v60, 0
  %344 = vmatprep.subr.bf16.mxu0 0
  %345 = vmatpush1.bf16.msra.mxu0 %v233
  %346 = vmatprep.subr.bf16.mxu0 0
  %347 = vmatpush1.bf16.msra.mxu0 %v234
  %348 = vmatprep.subr.bf16.mxu0 0
  %349 = vmatpush1.bf16.msra.mxu0 %v235
  %350 = vmatprep.subr.bf16.mxu0 0
  %351 = vmatpush1.bf16.msra.mxu0 %v236
  %352 = vmatprep.subr.bf16.mxu0 0
  %353 = vmatpush1.bf16.msra.mxu0 0
  %354 = vmatprep.subr.bf16.mxu0 0
  %355 = vmatpush1.bf16.msra.mxu0 0
  %356 = vmatprep.subr.bf16.mxu0 0
  %357 = vmatpush1.bf16.msra.mxu0 0
  %358 = vmatprep.subr.bf16.mxu0 0
  %359 = vmatpush1.bf16.msra.mxu0 0
  %360 = vmatprep.subr.bf16.mxu0 0
  %361 = vmatpush1.bf16.msra.mxu0 0
  %362 = vmatprep.subr.bf16.mxu0 0
  %363 = vmatpush1.bf16.msra.mxu0 0
  %364 = vmatprep.subr.bf16.mxu0 0
  %365 = vmatpush1.bf16.msra.mxu0 0
  %366 = vmatprep.subr.bf16.mxu0 0
  %367 = vmatpush1.bf16.msra.mxu0 0
  %368 = vmatprep.subr.bf16.mxu0 0
  %369 = vmatpush1.bf16.msra.mxu0 0
  %370 = vmatprep.subr.bf16.mxu0 0
  %371 = vmatpush1.bf16.msra.mxu0 0
  %372 = vmatprep.subr.bf16.mxu0 0
  %373 = vmatpush1.bf16.msra.mxu0 0
  %374 = vmatprep.subr.bf16.mxu0 0
  %375 = vmatpush1.bf16.msra.mxu0 0
  %376 = vmatprep.mubr.bf16.mxu0 0
  %377 = vmatmul.mubr.bf16.gmra.mrb[0].mxu0 %v342
  %v378 = vpop.f32.mrb[0].mxu0
  %v379 = vadd.f32 0.0, %v378
  %v380 = vpop.f32.mrb[0].mxu0
  %v381 = vpop.f32.mrb[0].mxu0
  %v382 = vpop.f32.mrb[0].mxu0
  %383 = vdwg.mxu0
  %v384 = vadd.f32 %v336, %v379
  %386 = vset.pattern.permute.xlu0 0
  %387 = vperm.xlu0 %386, %v61
  %v388 = vpop.permute.xlu0 %387
  %v390 = vadd.f32 %v384, %v388
  %v391 = vmax.f32 %v390, 0.0
  %393 = vset.pattern.permute.xlu0 0
  %394 = vperm.xlu0 %393, %v62
  %v395 = vpop.permute.xlu0 %394
  %v397 = vmul.f32 %v395, %v391
  %v398 = vrot.slane %v397, 4
  %v399 = vadd.f32 %v397, %v398
  %v400 = vrot.slane %v399, 2
  %v401 = vadd.f32 %v399, %v400
  %v402 = vrot.slane %v401, 1
  %v403 = vadd.f32 %v401, %v402
  %405 = vset.pattern.permute.xlu0 0
  %406 = vperm.xlu0 %405, %v63
  %v407 = vpop.permute.xlu0 %406
  %v409 = vlaneseq
  %v410 = vshrl.u32 %v409, 7
  %v411 = vsub.s32 0, %v410
  %v412 = vrot.slane %v407, %v411
  %v413 = vadd.f32 %v403, %v412
  %414 = vst [vmem:[%s9] sm:$0x1] %v413
  // Predicated region
  $region38: #{backbone_forward.1} parent=0 // pred_check
    _
  $region39: #{backbone_forward.1} parent=0 // pred_check_branch
    %416 = sbr.rel (0) target = $region41
  $region40: #{backbone_forward.1} parent=0 // pred_region
    _
  $region41: #{backbone_forward.1} parent=0 // pred_fallthru
    _
  // Predicated region
  $region42: #{backbone_forward.1} parent=0 // pred_check
    _
  $region43: #{backbone_forward.1} parent=0 // pred_check_branch
    %418 = sbr.rel (0) target = $region45
  $region44: #{backbone_forward.1} parent=0 // pred_region
    _
  $region45: #{backbone_forward.1} parent=0 // pred_fallthru
    _

</llo_original>
